<compile_context>
chip_gen: v7x
topology: tpu7x:2x2x1
jax: 0.10.0
libtpu: 0.0.40
codegen_flags: <defaults>
</compile_context>

<pallas_src>
import jax
import jax.numpy as jnp
from jax.experimental import pallas as pl
from jax.experimental.pallas import tpu as pltpu


TB = 128           # batch rows per grid step
PACKED_ROWS = 272  # 8 (w1+b1) + 128 (w2) + 128 (w3 padded) + 8 (bias block)


def _policy_net_kernel(x_ref, p_ref, out_ref):
    x = x_ref[...]                                   # (TB, 8) f32: [state(4), 1, 0, 0, 0]

    # ----- layer 1 + relu: VPU broadcast-FMAs (bias folded via the constant-1 col) -----
    w1 = p_ref[0:8, :]                               # (8, 128); rows 0-3 = w1, row 4 = b1
    h1 = x[:, 0:1] * w1[0:1, :]                      # (TB, 128)
    for k in range(1, 5):                            # static unroll, 4 more FMAs
        h1 = h1 + x[:, k:k + 1] * w1[k:k + 1, :]
    h1 = jnp.maximum(h1, 0.0)

    # ----- layer 2 + relu: MXU -----
    w2 = p_ref[8:136, :]                             # (128, 128)
    b2 = p_ref[264:265, :]                           # (1, 128)
    h2 = jnp.dot(h1, w2, preferred_element_type=jnp.float32) + b2
    h2 = jnp.maximum(h2, 0.0)

    # ----- layer 3: MXU, lane-dense (padded to 128 output lanes) -----
    w3 = p_ref[136:264, :]                           # (128, 128), cols 0-1 real
    b3 = p_ref[265:266, :]                           # (1, 128),   cols 0-1 real
    logits = jnp.dot(h2, w3, preferred_element_type=jnp.float32) + b3   # (TB, 128)

    # ----- softmax over the 2 real action lanes (== torch softmax(dim=0) per state) -----
    lane = jax.lax.broadcasted_iota(jnp.int32, logits.shape, 1)
    valid = lane < 2
    masked = jnp.where(valid, logits, jnp.float32(-1e30))
    m = jnp.max(masked, axis=-1, keepdims=True)
    e = jnp.where(valid, jnp.exp(masked - m), 0.0)
    denom = jnp.sum(e, axis=-1, keepdims=True)
    # Exact normalization (full-precision reciprocal on the EUP); guarantees rows sum to 1.
    out_ref[...] = e / denom


def pack_params(params):
    """Pack (w1, b1, w2, b2, w3, b3) into one (272, 128) f32 buffer.

    Weights are stored transposed relative to torch nn.Linear: (in_features, out_features).
    """
    w1, b1, w2, b2, w3, b3 = params
    packed = jnp.zeros((PACKED_ROWS, 128), jnp.float32)
    packed = packed.at[0:4, :].set(w1.astype(jnp.float32))
    packed = packed.at[4, :].set(b1.reshape(128).astype(jnp.float32))
    packed = packed.at[8:136, :].set(w2.astype(jnp.float32))
    packed = packed.at[136:264, 0:2].set(w3.astype(jnp.float32))
    packed = packed.at[264, :].set(b2.reshape(128).astype(jnp.float32))
    packed = packed.at[265, 0:2].set(b3.reshape(2).astype(jnp.float32))
    return packed


def policy_net_forward(x, packed_params):
    """x: (4,) single state or (B, 4) batch.  Returns (2,) or (B, 2) action probs."""
    single = (x.ndim == 1)
    xb = x.reshape(1, -1) if single else x
    xb = xb.astype(jnp.float32)
    B = xb.shape[0]
    Bp = max(TB, pl.cdiv(B, TB) * TB)

    # Augment: cols 0-3 = state, col 4 = 1.0 (bias term for layer 1), cols 5-7 = 0.
    x_aug = jnp.zeros((Bp, 8), jnp.float32)
    x_aug = x_aug.at[:B, 0:4].set(xb)
    x_aug = x_aug.at[:B, 4].set(1.0)

    out = pl.pallas_call(
        _policy_net_kernel,
        out_shape=jax.ShapeDtypeStruct((Bp, 128), jnp.float32),
        grid=(Bp // TB,),
        in_specs=[
            pl.BlockSpec((TB, 8), lambda i: (i, 0)),             # per-step batch tile
            pl.BlockSpec((PACKED_ROWS, 128), lambda i: (0, 0)),  # weights: resident in VMEM
        ],
        out_specs=pl.BlockSpec((TB, 128), lambda i: (i, 0)),     # lane-dense output slab
        compiler_params=pltpu.CompilerParams(
            dimension_semantics=("parallel",)),                  # shard batch across TCs (v7x)
    )(x_aug, packed_params)

    probs = out[:B, :2]
    return probs.reshape(2) if single else probs


def init_params(key):
    """Deterministic init mimicking PyTorch nn.Linear default U[-1/sqrt(fan_in), 1/sqrt(fan_in)].

    Weights stored transposed relative to torch: (in_features, out_features).
    """
    def linear(key, fan_in, fan_out):
        kw, kb = jax.random.split(key)
        bound = 1.0 / jnp.sqrt(jnp.float32(fan_in))
        w = jax.random.uniform(kw, (fan_in, fan_out), jnp.float32, -bound, bound)
        b = jax.random.uniform(kb, (1, fan_out), jnp.float32, -bound, bound)
        return w, b

    k1, k2, k3 = jax.random.split(key, 3)
    w1, b1 = linear(k1, 4, 128)
    w2, b2 = linear(k2, 128, 128)
    w3, b3 = linear(k3, 128, 2)
    return (w1, b1, w2, b2, w3, b3)


def _reference_forward(x, params):
    """Pure-JAX reference matching the PyTorch module semantics."""
    w1, b1, w2, b2, w3, b3 = params
    single = (x.ndim == 1)
    xb = x.reshape(1, -1).astype(jnp.float32) if single else x.astype(jnp.float32)
    h = jnp.maximum(xb @ w1 + b1, 0.0)
    h = jnp.maximum(h @ w2 + b2, 0.0)
    logits = h @ w3 + b3
    p = jax.nn.softmax(logits, axis=-1)       # == torch softmax(dim=0) on the (2,) output
    return p.reshape(2) if single else p


if __name__ == "__main__":
    key = jax.random.PRNGKey(0)
    k_params, k_xb, k_x1 = jax.random.split(key, 3)

    params = init_params(k_params)
    packed = pack_params(params)

    # Batched path: 256 CartPole-like states -> grid of 2 steps.
    B = 256
    xb = jax.random.normal(k_xb, (B, 4), jnp.float32)
    probs_b = jax.block_until_ready(policy_net_forward(xb, packed))
    ref_b = _reference_forward(xb, params)
    assert probs_b.shape == (B, 2)
    assert jnp.allclose(probs_b, ref_b, atol=2e-3, rtol=2e-3), (probs_b[:4], ref_b[:4])
    assert jnp.allclose(jnp.sum(probs_b, axis=-1), 1.0, atol=1e-3)

    # Single-state path (original torch module signature: x of shape (4,)).
    x1 = jax.random.normal(k_x1, (4,), jnp.float32)
    probs_1 = jax.block_until_ready(policy_net_forward(x1, packed))
    ref_1 = _reference_forward(x1, params)
    assert probs_1.shape == (2,)
    assert jnp.allclose(probs_1, ref_1, atol=2e-3, rtol=2e-3), (probs_1, ref_1)
    assert jnp.allclose(jnp.sum(probs_1), 1.0, atol=1e-3)

    print("KERNEL_OK")
</pallas_src>

<mosaic_0001>
module attributes {stable_mosaic.version = 11 : i64} {
  func.func @_policy_net_kernel(%arg0: i32, %arg1: memref<128x8xf32, #tpu.memory_space<vmem>>, %arg2: memref<272x128xf32, #tpu.memory_space<vmem>>, %arg3: memref<128x128xf32, #tpu.memory_space<vmem>>) attributes {dimension_semantics = [#tpu.dimension_semantics<parallel>], iteration_bounds = array<i64: 2>, scalar_prefetch = 0 : i64, scratch_operands = 0 : i64, tpu.core_type = #tpu.core_type<tc>, window_params = [{transform_indices = @transform_0, window_bounds = array<i64: 128, 8>}, {pipeline_mode = #tpu.pipeline_mode<synchronous>, transform_indices = @transform_1, window_bounds = array<i64: 272, 128>}, {transform_indices = @transform_2, window_bounds = array<i64: 128, 128>}]} {
    %c0 = arith.constant 0 : index
    %c0_0 = arith.constant 0 : index
    %0 = vector.load %arg1[%c0, %c0_0] : memref<128x8xf32, #tpu.memory_space<vmem>>, vector<128x8xf32>
    %c0_1 = arith.constant 0 : index
    %c0_2 = arith.constant 0 : index
    %1 = vector.load %arg2[%c0_1, %c0_2] : memref<272x128xf32, #tpu.memory_space<vmem>>, vector<8x128xf32>
    %2 = vector.extract_strided_slice %0 {offsets = [0, 0], sizes = [128, 1], strides = [1, 1]} : vector<128x8xf32> to vector<128x1xf32>
    %3 = vector.extract_strided_slice %1 {offsets = [0, 0], sizes = [1, 128], strides = [1, 1]} : vector<8x128xf32> to vector<1x128xf32>
    %4 = vector.broadcast %2 : vector<128x1xf32> to vector<128x128xf32>
    %5 = vector.broadcast %3 : vector<1x128xf32> to vector<128x128xf32>
    %6 = arith.mulf %4, %5 : vector<128x128xf32>
    %7 = vector.extract_strided_slice %0 {offsets = [0, 1], sizes = [128, 1], strides = [1, 1]} : vector<128x8xf32> to vector<128x1xf32>
    %8 = vector.extract_strided_slice %1 {offsets = [1, 0], sizes = [1, 128], strides = [1, 1]} : vector<8x128xf32> to vector<1x128xf32>
    %9 = vector.broadcast %7 : vector<128x1xf32> to vector<128x128xf32>
    %10 = vector.broadcast %8 : vector<1x128xf32> to vector<128x128xf32>
    %11 = arith.mulf %9, %10 : vector<128x128xf32>
    %12 = arith.addf %6, %11 : vector<128x128xf32>
    %13 = vector.extract_strided_slice %0 {offsets = [0, 2], sizes = [128, 1], strides = [1, 1]} : vector<128x8xf32> to vector<128x1xf32>
    %14 = vector.extract_strided_slice %1 {offsets = [2, 0], sizes = [1, 128], strides = [1, 1]} : vector<8x128xf32> to vector<1x128xf32>
    %15 = vector.broadcast %13 : vector<128x1xf32> to vector<128x128xf32>
    %16 = vector.broadcast %14 : vector<1x128xf32> to vector<128x128xf32>
    %17 = arith.mulf %15, %16 : vector<128x128xf32>
    %18 = arith.addf %12, %17 : vector<128x128xf32>
    %19 = vector.extract_strided_slice %0 {offsets = [0, 3], sizes = [128, 1], strides = [1, 1]} : vector<128x8xf32> to vector<128x1xf32>
    %20 = vector.extract_strided_slice %1 {offsets = [3, 0], sizes = [1, 128], strides = [1, 1]} : vector<8x128xf32> to vector<1x128xf32>
    %21 = vector.broadcast %19 : vector<128x1xf32> to vector<128x128xf32>
    %22 = vector.broadcast %20 : vector<1x128xf32> to vector<128x128xf32>
    %23 = arith.mulf %21, %22 : vector<128x128xf32>
    %24 = arith.addf %18, %23 : vector<128x128xf32>
    %25 = vector.extract_strided_slice %0 {offsets = [0, 4], sizes = [128, 1], strides = [1, 1]} : vector<128x8xf32> to vector<128x1xf32>
    %26 = vector.extract_strided_slice %1 {offsets = [4, 0], sizes = [1, 128], strides = [1, 1]} : vector<8x128xf32> to vector<1x128xf32>
    %27 = vector.broadcast %25 : vector<128x1xf32> to vector<128x128xf32>
    %28 = vector.broadcast %26 : vector<1x128xf32> to vector<128x128xf32>
    %29 = arith.mulf %27, %28 : vector<128x128xf32>
    %30 = arith.addf %24, %29 : vector<128x128xf32>
    %cst = arith.constant 0.000000e+00 : f32
    %31 = vector.broadcast %cst : f32 to vector<128x128xf32>
    %32 = arith.maximumf %30, %31 : vector<128x128xf32>
    %c8 = arith.constant 8 : index
    %c0_3 = arith.constant 0 : index
    %33 = vector.load %arg2[%c8, %c0_3] : memref<272x128xf32, #tpu.memory_space<vmem>>, vector<128x128xf32>
    %c264 = arith.constant 264 : index
    %c0_4 = arith.constant 0 : index
    %34 = vector.load %arg2[%c264, %c0_4] : memref<272x128xf32, #tpu.memory_space<vmem>>, vector<1x128xf32>
    %cst_5 = arith.constant dense<0.000000e+00> : vector<128x128xf32>
    %35 = tpu.matmul %32, %33, %cst_5 {dimension_numbers = #tpu.dot_dimension_numbers<[1], [0], [0], [1], [0, 0, 1, 1], [], []>} : vector<128x128xf32>, vector<128x128xf32>, vector<128x128xf32> -> vector<128x128xf32>
    %36 = vector.broadcast %34 : vector<1x128xf32> to vector<128x128xf32>
    %37 = arith.addf %35, %36 : vector<128x128xf32>
    %cst_6 = arith.constant 0.000000e+00 : f32
    %38 = vector.broadcast %cst_6 : f32 to vector<128x128xf32>
    %39 = arith.maximumf %37, %38 : vector<128x128xf32>
    %c136 = arith.constant 136 : index
    %c0_7 = arith.constant 0 : index
    %40 = vector.load %arg2[%c136, %c0_7] : memref<272x128xf32, #tpu.memory_space<vmem>>, vector<128x128xf32>
    %c265 = arith.constant 265 : index
    %c0_8 = arith.constant 0 : index
    %41 = vector.load %arg2[%c265, %c0_8] : memref<272x128xf32, #tpu.memory_space<vmem>>, vector<1x128xf32>
    %cst_9 = arith.constant dense<0.000000e+00> : vector<128x128xf32>
    %42 = tpu.matmul %39, %40, %cst_9 {dimension_numbers = #tpu.dot_dimension_numbers<[1], [0], [0], [1], [0, 0, 1, 1], [], []>} : vector<128x128xf32>, vector<128x128xf32>, vector<128x128xf32> -> vector<128x128xf32>
    %43 = vector.broadcast %41 : vector<1x128xf32> to vector<128x128xf32>
    %44 = arith.addf %42, %43 : vector<128x128xf32>
    %45 = tpu.iota {dimensions = array<i32: 1>} : vector<128x128xi32>
    %c2_i32 = arith.constant 2 : i32
    %46 = vector.broadcast %c2_i32 : i32 to vector<128x128xi32>
    %47 = arith.cmpi slt, %45, %46 : vector<128x128xi32>
    %cst_10 = arith.constant -1.000000e+30 : f32
    %48 = vector.broadcast %cst_10 : f32 to vector<128x128xf32>
    %49 = arith.select %47, %44, %48 : vector<128x128xi1>, vector<128x128xf32>
    %cst_11 = arith.constant dense<0xFF800000> : vector<128xf32>
    %50 = vector.multi_reduction <maximumf>, %49, %cst_11 [1] : vector<128x128xf32> to vector<128xf32>
    %51 = vector.shape_cast %50 : vector<128xf32> to vector<128x1xf32>
    %52 = vector.broadcast %51 : vector<128x1xf32> to vector<128x128xf32>
    %53 = arith.subf %49, %52 : vector<128x128xf32>
    %54 = math.exp %53 : vector<128x128xf32>
    %cst_12 = arith.constant 0.000000e+00 : f32
    %55 = vector.broadcast %cst_12 : f32 to vector<128x128xf32>
    %56 = arith.select %47, %54, %55 : vector<128x128xi1>, vector<128x128xf32>
    %cst_13 = arith.constant dense<0.000000e+00> : vector<128xf32>
    %57 = vector.multi_reduction <add>, %56, %cst_13 [1] : vector<128x128xf32> to vector<128xf32>
    %58 = vector.shape_cast %57 : vector<128xf32> to vector<128x1xf32>
    %59 = vector.broadcast %58 : vector<128x1xf32> to vector<128x128xf32>
    %60 = arith.divf %56, %59 : vector<128x128xf32>
    %c0_14 = arith.constant 0 : index
    %c0_15 = arith.constant 0 : index
    %61 = vector.load %arg3[%c0_14, %c0_15] : memref<128x128xf32, #tpu.memory_space<vmem>>, vector<128x128xf32>
    tpu.vector_store %arg3[%c0_14, %c0_15], %60 {strides = array<i32>} : memref<128x128xf32, #tpu.memory_space<vmem>>, vector<128x128xf32>,
    return
  }
  func.func @transform_0(%arg0: i32) -> (i32, i32) {
    %c0_i32 = arith.constant 0 : i32
    %c0_i32_0 = arith.constant 0 : i32
    return %arg0, %c0_i32 : i32, i32
  }
  func.func @transform_1(%arg0: i32) -> (i32, i32) {
    %c0_i32 = arith.constant 0 : i32
    %c0_i32_0 = arith.constant 0 : i32
    %c0_i32_1 = arith.constant 0 : i32
    return %c0_i32, %c0_i32_0 : i32, i32
  }
  func.func @transform_2(%arg0: i32) -> (i32, i32) {
    %c0_i32 = arith.constant 0 : i32
    %c0_i32_0 = arith.constant 0 : i32
    return %arg0, %c0_i32 : i32, i32
  }
}

</mosaic_0001>

<llo_original>
// kernel: tpu_custom_call.1
$region0: #{tpu_custom_call.1}
  #allocation0 [shape = 'u32[]', space=smem, size = 0x4, offset = 0x4, fixed_abs, tag = 'smem constant byte address 0x4 - core index']
  #allocation1 [shape = 'u32[144,128]{1,0:T(1,128)}', space=vmem, size = 0x12000, scoped, tag = 'internal scratch']
  %s0 = inlined_call_operand.vmem [shape: f32[256,8], index: 0, kind: input, shape index: {}]
  %s1 = inlined_call_operand.vmem [shape: f32[272,128], index: 1, kind: input, shape index: {}]
  %s2 = inlined_call_operand.hbm [shape: f32[256,128], index: 2, kind: output, shape index: {}]
  %s3 = sld [smem:[#allocation0]]
  $region41: #{tpu_custom_call.1} parent=0
    _
  %s5 = ssub.s32 1, %s3
  %s6 = scalar_select 0, %s5, %s3
  $region1: #{tpu_custom_call.1} parent=0
    #allocation2 [shape = 'u8[131072]{0}', space=vmem, size = 0x20000, scoped, tag = 'output window, operand 0']
    #allocation3 [shape = 's32[2]{0}', space=sflag, size = 0x8, scoped, tag = 'scoped memory for tpu_custom_call.1']
    %7 = vsyncpa [#allocation3], 0
    %s8 = scalar_lea.sflag [#allocation3], 1
    %9 = vsyncpa %s8, 0
    loop: start=0, step=1, limit=4
    $region2: #{tpu_custom_call.1} parent=1 // loop_pre_header
      _
    $region3: #{tpu_custom_call.1} parent=1 // loop_header
      %s11 = sphi 0, %s15
      %p12 = scmp.ge.s32.totalorder %s11, 4
      %s21 = sphi 0, %s23
      %s24 = sphi 0, %s21
      %s25 = sphi 0, %s24
      %s41 = sphi 0, %s25
      %s45 = sphi 0, %s45
      %s47 = sphi 0, %s45
      %s48 = sphi 0, %s47
      %s62 = sphi 0, %s48
      %s68 = sphi 0, %s70
      %s71 = sphi 0, %s68
      %s72 = sphi 0, %s71
      %s88 = sphi 0, %s72
    $region4: #{tpu_custom_call.1} parent=1 // loop_header_branch
      %14 = sbr.rel (%p12) target = $region8
    $region5: #{tpu_custom_call.1} parent=1 // loop_body
      %s16 = ssub.s32 %s11, 1
      %s17 = ssub.s32 %s11, 2
      %s18 = sadd.s32 %s11, 1
      %s19 = ssub.s32 %s11, %s18
      %p20 = scmp.eq.s32.totalorder %s19, 0
      %s22 = sadd.s32 %s21, 1
      %s23 = scalar_select %p20, %s21, %s22
      %p26 = pneg %p20
      %p27 = scmp.eq.s32.totalorder %s11, 1
      %p28 = por %p26, %p27
      %p29 = scmp.ne.s32.totalorder %s21, %s24
      %p30 = scmp.eq.s32.totalorder %s11, 0
      %p31 = por %p29, %p30
      %p32 = scmp.ne.s32.totalorder %s21, %s24
      %p33 = scmp.eq.s32.totalorder %s16, 1
      %p34 = por %p32, %p33
      %p35 = scmp.ne.s32.totalorder %s24, %s25
      %p36 = scmp.eq.s32.totalorder %s16, 0
      %p37 = por %p35, %p36
      %p38 = scmp.ne.s32.totalorder %s24, %s25
      %p39 = scmp.eq.s32.totalorder %s17, 1
      %p40 = por %p38, %p39
      %p42 = scmp.ne.s32.totalorder %s25, %s41
      %p43 = scmp.eq.s32.totalorder %s17, 0
      %p44 = por %p42, %p43
      %s46 = sadd.s32 %s45, 1
      %p49 = scmp.eq.s32.totalorder %s11, 1
      %p50 = scmp.ne.s32.totalorder %s45, %s47
      %p51 = scmp.eq.s32.totalorder %s11, 0
      %p52 = por %p50, %p51
      %p53 = scmp.ne.s32.totalorder %s45, %s47
      %p54 = scmp.eq.s32.totalorder %s16, 1
      %p55 = por %p53, %p54
      %p56 = scmp.ne.s32.totalorder %s47, %s48
      %p57 = scmp.eq.s32.totalorder %s16, 0
      %p58 = por %p56, %p57
      %p59 = scmp.ne.s32.totalorder %s47, %s48
      %p60 = scmp.eq.s32.totalorder %s17, 1
      %p61 = por %p59, %p60
      %p63 = scmp.ne.s32.totalorder %s48, %s62
      %p64 = scmp.eq.s32.totalorder %s17, 0
      %p65 = por %p63, %p64
      %s66 = ssub.s32 %s11, %s18
      %p67 = scmp.eq.s32.totalorder %s66, 0
      %s69 = sadd.s32 %s68, 1
      %s70 = scalar_select %p67, %s68, %s69
      %p73 = pneg %p67
      %p74 = scmp.eq.s32.totalorder %s11, 1
      %p75 = por %p73, %p74
      %p76 = scmp.ne.s32.totalorder %s68, %s71
      %p77 = scmp.eq.s32.totalorder %s11, 0
      %p78 = por %p76, %p77
      %p79 = scmp.ne.s32.totalorder %s68, %s71
      %p80 = scmp.eq.s32.totalorder %s16, 1
      %p81 = por %p79, %p80
      %p82 = scmp.ne.s32.totalorder %s71, %s72
      %p83 = scmp.eq.s32.totalorder %s16, 0
      %p84 = por %p82, %p83
      %p85 = scmp.ne.s32.totalorder %s71, %s72
      %p86 = scmp.eq.s32.totalorder %s17, 1
      %p87 = por %p85, %p86
      %p89 = scmp.ne.s32.totalorder %s72, %s88
      %p90 = scmp.eq.s32.totalorder %s17, 0
      %p91 = por %p89, %p90
      %p92 = scmp.le.s32.totalorder 1, %s11
      %p93 = scmp.lt.s32.totalorder %s11, 3
      %p94 = pnand %p92, %p93
      %p95 = pneg %p94
      // Predicated region
      $region9: #{tpu_custom_call.1} parent=5 // pred_check
        _
      $region10: #{tpu_custom_call.1} parent=5 // pred_check_branch
        %97 = sbr.rel (%p94) target = $region12
      $region11: #{tpu_custom_call.1} parent=5 // pred_region
        %s98 = ssub.s32 %s11, 1
        // Predicated region
        $region13: #{tpu_custom_call.1} parent=11 // pred_check
          %p99 = pneg %p58
        $region14: #{tpu_custom_call.1} parent=11 // pred_check_branch
          %101 = sbr.rel (%p99) target = $region16
        $region15: #{tpu_custom_call.1} parent=11 // pred_region
          _
        $region16: #{tpu_custom_call.1} parent=11 // pred_fallthru
          _
      $region12: #{tpu_custom_call.1} parent=5 // pred_fallthru
        _
      %p102 = scmp.lt.s32.totalorder %s11, 2
      // Predicated region
      $region17: #{tpu_custom_call.1} parent=5 // pred_check
        %p103 = pneg %p102
      $region18: #{tpu_custom_call.1} parent=5 // pred_check_branch
        %105 = sbr.rel (%p103) target = $region20
      $region19: #{tpu_custom_call.1} parent=5 // pred_region
        // Predicated region
        $region21: #{tpu_custom_call.1} parent=19 // pred_check
          %p106 = pneg %p31
        $region22: #{tpu_custom_call.1} parent=19 // pred_check_branch
          %108 = sbr.rel (%p106) target = $region24
        $region23: #{tpu_custom_call.1} parent=19 // pred_region
          %s109 = smul.u32 16, %s11
          %p110 = scmp.lt.s32.totalorder %s109, 31
          %s111 = scalar_select %p110, %s109, 31
          %s112 = smul.addr %s111, 8
          %s113 = scalar_lea.vmem %s0, %s112
          %s114 = smul.u32 16, %s11
        $region24: #{tpu_custom_call.1} parent=19 // pred_fallthru
          _
      $region20: #{tpu_custom_call.1} parent=5 // pred_fallthru
        _
      %p115 = scmp.le.s32.totalorder 1, %s11
      %p116 = scmp.lt.s32.totalorder %s11, 3
      %p117 = pnand %p115, %p116
      %p118 = pneg %p117
      // Predicated region
      $region25: #{tpu_custom_call.1} parent=5 // pred_check
        _
      $region26: #{tpu_custom_call.1} parent=5 // pred_check_branch
        %120 = sbr.rel (%p117) target = $region28
      $region27: #{tpu_custom_call.1} parent=5 // pred_region
        %s121 = ssub.s32 %s11, 1
        %s122 = smul.u32 16, %s16
        %p123 = scmp.lt.s32.totalorder %s122, 31
        %s124 = scalar_select %p123, %s122, 31
        %s125 = smul.addr %s124, 8
        %s126 = scalar_lea.vmem %s0, %s125
        %p127 = pneg %p37
        %p128 = pneg %p34
        %p129 = pneg %p58
        %p130 = pneg %p55
        %p131 = pneg %p84
        %p132 = pneg %p81
        %s133 = sand.u32 %s71, 1
        %s134 = scalar_lea.sflag [#allocation3], %s133
        %s135 = sand.u32 %s71, 1
        %s136 = smul.addr %s135, 128
        %s137 = scalar_lea.vmem [#allocation2], %s136
        %s138 = smul.u32 16, %s16
        %p139 = scmp.lt.s32.totalorder %s138, 31
        %s140 = scalar_select %p139, %s138, 31
        %s141 = smul.addr %s140, 8
        %s142 = scalar_lea.vmem %s0, %s141
        %s143 = smul.u32 16, %s16
        %s144 = smul.u32 16, %s16
        %v145 = vld [vmem:[%s142] sm:$0xff]
        %v146 = vld [vmem:[%s142 + $0x8] sm:$0xff]
        %v147 = vld [vmem:[%s142 + $0x10] sm:$0xff]
        %v148 = vld [vmem:[%s142 + $0x18] sm:$0xff]
        %v149 = vld [vmem:[%s142 + $0x20] sm:$0xff]
        %v150 = vld [vmem:[%s142 + $0x28] sm:$0xff]
        %v151 = vld [vmem:[%s142 + $0x30] sm:$0xff]
        %v152 = vld [vmem:[%s142 + $0x38] sm:$0xff]
        %v153 = vld [vmem:[%s142 + $0x40] sm:$0xff]
        %v154 = vld [vmem:[%s142 + $0x48] sm:$0xff]
        %v155 = vld [vmem:[%s142 + $0x50] sm:$0xff]
        %v156 = vld [vmem:[%s142 + $0x58] sm:$0xff]
        %v157 = vld [vmem:[%s142 + $0x60] sm:$0xff]
        %v158 = vld [vmem:[%s142 + $0x68] sm:$0xff]
        %v159 = vld [vmem:[%s142 + $0x70] sm:$0xff]
        %v160 = vld [vmem:[%s142 + $0x78] sm:$0xff]
        %v161 = vld [vmem:[%s1] sm:$0xff]
        %163 = vset.pattern.permute.xlu0 0
        %164 = vperm.xlu0 %163, %v145
        %v165 = vpop.permute.xlu0 %164
        %168 = vset.pattern.permute.xlu0 0
        %169 = vperm.xlu0 %168, %v146
        %v170 = vpop.permute.xlu0 %169
        %173 = vset.pattern.permute.xlu0 0
        %174 = vperm.xlu0 %173, %v147
        %v175 = vpop.permute.xlu0 %174
        %178 = vset.pattern.permute.xlu0 0
        %179 = vperm.xlu0 %178, %v148
        %v180 = vpop.permute.xlu0 %179
        %183 = vset.pattern.permute.xlu0 0
        %184 = vperm.xlu0 %183, %v149
        %v185 = vpop.permute.xlu0 %184
        %188 = vset.pattern.permute.xlu0 0
        %189 = vperm.xlu0 %188, %v150
        %v190 = vpop.permute.xlu0 %189
        %193 = vset.pattern.permute.xlu0 0
        %194 = vperm.xlu0 %193, %v151
        %v195 = vpop.permute.xlu0 %194
        %198 = vset.pattern.permute.xlu0 0
        %199 = vperm.xlu0 %198, %v152
        %v200 = vpop.permute.xlu0 %199
        %203 = vset.pattern.permute.xlu0 0
        %204 = vperm.xlu0 %203, %v153
        %v205 = vpop.permute.xlu0 %204
        %208 = vset.pattern.permute.xlu0 0
        %209 = vperm.xlu0 %208, %v154
        %v210 = vpop.permute.xlu0 %209
        %213 = vset.pattern.permute.xlu0 0
        %214 = vperm.xlu0 %213, %v155
        %v215 = vpop.permute.xlu0 %214
        %218 = vset.pattern.permute.xlu0 0
        %219 = vperm.xlu0 %218, %v156
        %v220 = vpop.permute.xlu0 %219
        %223 = vset.pattern.permute.xlu0 0
        %224 = vperm.xlu0 %223, %v157
        %v225 = vpop.permute.xlu0 %224
        %228 = vset.pattern.permute.xlu0 0
        %229 = vperm.xlu0 %228, %v158
        %v230 = vpop.permute.xlu0 %229
        %233 = vset.pattern.permute.xlu0 0
        %234 = vperm.xlu0 %233, %v159
        %v235 = vpop.permute.xlu0 %234
        %238 = vset.pattern.permute.xlu0 0
        %239 = vperm.xlu0 %238, %v160
        %v240 = vpop.permute.xlu0 %239
        %v242 = vlaneseq
        %v243 = vshrl.u32 %v242, 7
        %v244 = vsub.s32 0, %v243
        %v245 = vrot.slane %v161, %v244
        %v246 = vmul.f32 %v165, %v245
        %v247 = vmul.f32 %v170, %v245
        %v248 = vmul.f32 %v175, %v245
        %v249 = vmul.f32 %v180, %v245
        %v250 = vmul.f32 %v185, %v245
        %v251 = vmul.f32 %v190, %v245
        %v252 = vmul.f32 %v195, %v245
        %v253 = vmul.f32 %v200, %v245
        %v254 = vmul.f32 %v205, %v245
        %v255 = vmul.f32 %v210, %v245
        %v256 = vmul.f32 %v215, %v245
        %v257 = vmul.f32 %v220, %v245
        %v258 = vmul.f32 %v225, %v245
        %v259 = vmul.f32 %v230, %v245
        %v260 = vmul.f32 %v235, %v245
        %v261 = vmul.f32 %v240, %v245
        %262 = vset.pattern.permute.xlu0 1
        %263 = vperm.xlu0 %262, %v145
        %v264 = vpop.permute.xlu0 %263
        %266 = vset.pattern.permute.xlu0 1
        %267 = vperm.xlu0 %266, %v146
        %v268 = vpop.permute.xlu0 %267
        %270 = vset.pattern.permute.xlu0 1
        %271 = vperm.xlu0 %270, %v147
        %v272 = vpop.permute.xlu0 %271
        %274 = vset.pattern.permute.xlu0 1
        %275 = vperm.xlu0 %274, %v148
        %v276 = vpop.permute.xlu0 %275
        %278 = vset.pattern.permute.xlu0 1
        %279 = vperm.xlu0 %278, %v149
        %v280 = vpop.permute.xlu0 %279
        %282 = vset.pattern.permute.xlu0 1
        %283 = vperm.xlu0 %282, %v150
        %v284 = vpop.permute.xlu0 %283
        %286 = vset.pattern.permute.xlu0 1
        %287 = vperm.xlu0 %286, %v151
        %v288 = vpop.permute.xlu0 %287
        %290 = vset.pattern.permute.xlu0 1
        %291 = vperm.xlu0 %290, %v152
        %v292 = vpop.permute.xlu0 %291
        %294 = vset.pattern.permute.xlu0 1
        %295 = vperm.xlu0 %294, %v153
        %v296 = vpop.permute.xlu0 %295
        %298 = vset.pattern.permute.xlu0 1
        %299 = vperm.xlu0 %298, %v154
        %v300 = vpop.permute.xlu0 %299
        %302 = vset.pattern.permute.xlu0 1
        %303 = vperm.xlu0 %302, %v155
        %v304 = vpop.permute.xlu0 %303
        %306 = vset.pattern.permute.xlu0 1
        %307 = vperm.xlu0 %306, %v156
        %v308 = vpop.permute.xlu0 %307
        %310 = vset.pattern.permute.xlu0 1
        %311 = vperm.xlu0 %310, %v157
        %v312 = vpop.permute.xlu0 %311
        %314 = vset.pattern.permute.xlu0 1
        %315 = vperm.xlu0 %314, %v158
        %v316 = vpop.permute.xlu0 %315
        %318 = vset.pattern.permute.xlu0 1
        %319 = vperm.xlu0 %318, %v159
        %v320 = vpop.permute.xlu0 %319
        %322 = vset.pattern.permute.xlu0 1
        %323 = vperm.xlu0 %322, %v160
        %v324 = vpop.permute.xlu0 %323
        %v326 = vlaneseq
        %v327 = vshrl.u32 %v326, 7
        %v328 = vsub.s32 1, %v327
        %v329 = vrot.slane %v161, %v328
        %v330 = vmul.f32 %v264, %v329
        %v331 = vmul.f32 %v268, %v329
        %v332 = vmul.f32 %v272, %v329
        %v333 = vmul.f32 %v276, %v329
        %v334 = vmul.f32 %v280, %v329
        %v335 = vmul.f32 %v284, %v329
        %v336 = vmul.f32 %v288, %v329
        %v337 = vmul.f32 %v292, %v329
        %v338 = vmul.f32 %v296, %v329
        %v339 = vmul.f32 %v300, %v329
        %v340 = vmul.f32 %v304, %v329
        %v341 = vmul.f32 %v308, %v329
        %v342 = vmul.f32 %v312, %v329
        %v343 = vmul.f32 %v316, %v329
        %v344 = vmul.f32 %v320, %v329
        %v345 = vmul.f32 %v324, %v329
        %v346 = vadd.f32 %v246, %v330
        %v347 = vadd.f32 %v247, %v331
        %v348 = vadd.f32 %v248, %v332
        %v349 = vadd.f32 %v249, %v333
        %v350 = vadd.f32 %v250, %v334
        %v351 = vadd.f32 %v251, %v335
        %v352 = vadd.f32 %v252, %v336
        %v353 = vadd.f32 %v253, %v337
        %v354 = vadd.f32 %v254, %v338
        %v355 = vadd.f32 %v255, %v339
        %v356 = vadd.f32 %v256, %v340
        %v357 = vadd.f32 %v257, %v341
        %v358 = vadd.f32 %v258, %v342
        %v359 = vadd.f32 %v259, %v343
        %v360 = vadd.f32 %v260, %v344
        %v361 = vadd.f32 %v261, %v345
        %362 = vset.pattern.permute.xlu0 2
        %363 = vperm.xlu0 %362, %v145
        %v364 = vpop.permute.xlu0 %363
        %366 = vset.pattern.permute.xlu0 2
        %367 = vperm.xlu0 %366, %v146
        %v368 = vpop.permute.xlu0 %367
        %370 = vset.pattern.permute.xlu0 2
        %371 = vperm.xlu0 %370, %v147
        %v372 = vpop.permute.xlu0 %371
        %374 = vset.pattern.permute.xlu0 2
        %375 = vperm.xlu0 %374, %v148
        %v376 = vpop.permute.xlu0 %375
        %378 = vset.pattern.permute.xlu0 2
        %379 = vperm.xlu0 %378, %v149
        %v380 = vpop.permute.xlu0 %379
        %382 = vset.pattern.permute.xlu0 2
        %383 = vperm.xlu0 %382, %v150
        %v384 = vpop.permute.xlu0 %383
        %386 = vset.pattern.permute.xlu0 2
        %387 = vperm.xlu0 %386, %v151
        %v388 = vpop.permute.xlu0 %387
        %390 = vset.pattern.permute.xlu0 2
        %391 = vperm.xlu0 %390, %v152
        %v392 = vpop.permute.xlu0 %391
        %394 = vset.pattern.permute.xlu0 2
        %395 = vperm.xlu0 %394, %v153
        %v396 = vpop.permute.xlu0 %395
        %398 = vset.pattern.permute.xlu0 2
        %399 = vperm.xlu0 %398, %v154
        %v400 = vpop.permute.xlu0 %399
        %402 = vset.pattern.permute.xlu0 2
        %403 = vperm.xlu0 %402, %v155
        %v404 = vpop.permute.xlu0 %403
        %406 = vset.pattern.permute.xlu0 2
        %407 = vperm.xlu0 %406, %v156
        %v408 = vpop.permute.xlu0 %407
        %410 = vset.pattern.permute.xlu0 2
        %411 = vperm.xlu0 %410, %v157
        %v412 = vpop.permute.xlu0 %411
        %414 = vset.pattern.permute.xlu0 2
        %415 = vperm.xlu0 %414, %v158
        %v416 = vpop.permute.xlu0 %415
        %418 = vset.pattern.permute.xlu0 2
        %419 = vperm.xlu0 %418, %v159
        %v420 = vpop.permute.xlu0 %419
        %422 = vset.pattern.permute.xlu0 2
        %423 = vperm.xlu0 %422, %v160
        %v424 = vpop.permute.xlu0 %423
        %v426 = vlaneseq
        %v427 = vshrl.u32 %v426, 7
        %v428 = vsub.s32 2, %v427
        %v429 = vrot.slane %v161, %v428
        %v430 = vmul.f32 %v364, %v429
        %v431 = vmul.f32 %v368, %v429
        %v432 = vmul.f32 %v372, %v429
        %v433 = vmul.f32 %v376, %v429
        %v434 = vmul.f32 %v380, %v429
        %v435 = vmul.f32 %v384, %v429
        %v436 = vmul.f32 %v388, %v429
        %v437 = vmul.f32 %v392, %v429
        %v438 = vmul.f32 %v396, %v429
        %v439 = vmul.f32 %v400, %v429
        %v440 = vmul.f32 %v404, %v429
        %v441 = vmul.f32 %v408, %v429
        %v442 = vmul.f32 %v412, %v429
        %v443 = vmul.f32 %v416, %v429
        %v444 = vmul.f32 %v420, %v429
        %v445 = vmul.f32 %v424, %v429
        %v446 = vadd.f32 %v346, %v430
        %v447 = vadd.f32 %v347, %v431
        %v448 = vadd.f32 %v348, %v432
        %v449 = vadd.f32 %v349, %v433
        %v450 = vadd.f32 %v350, %v434
        %v451 = vadd.f32 %v351, %v435
        %v452 = vadd.f32 %v352, %v436
        %v453 = vadd.f32 %v353, %v437
        %v454 = vadd.f32 %v354, %v438
        %v455 = vadd.f32 %v355, %v439
        %v456 = vadd.f32 %v356, %v440
        %v457 = vadd.f32 %v357, %v441
        %v458 = vadd.f32 %v358, %v442
        %v459 = vadd.f32 %v359, %v443
        %v460 = vadd.f32 %v360, %v444
        %v461 = vadd.f32 %v361, %v445
        %462 = vset.pattern.permute.xlu0 3
        %463 = vperm.xlu0 %462, %v145
        %v464 = vpop.permute.xlu0 %463
        %466 = vset.pattern.permute.xlu0 3
        %467 = vperm.xlu0 %466, %v146
        %v468 = vpop.permute.xlu0 %467
        %470 = vset.pattern.permute.xlu0 3
        %471 = vperm.xlu0 %470, %v147
        %v472 = vpop.permute.xlu0 %471
        %474 = vset.pattern.permute.xlu0 3
        %475 = vperm.xlu0 %474, %v148
        %v476 = vpop.permute.xlu0 %475
        %478 = vset.pattern.permute.xlu0 3
        %479 = vperm.xlu0 %478, %v149
        %v480 = vpop.permute.xlu0 %479
        %482 = vset.pattern.permute.xlu0 3
        %483 = vperm.xlu0 %482, %v150
        %v484 = vpop.permute.xlu0 %483
        %486 = vset.pattern.permute.xlu0 3
        %487 = vperm.xlu0 %486, %v151
        %v488 = vpop.permute.xlu0 %487
        %490 = vset.pattern.permute.xlu0 3
        %491 = vperm.xlu0 %490, %v152
        %v492 = vpop.permute.xlu0 %491
        %494 = vset.pattern.permute.xlu0 3
        %495 = vperm.xlu0 %494, %v153
        %v496 = vpop.permute.xlu0 %495
        %498 = vset.pattern.permute.xlu0 3
        %499 = vperm.xlu0 %498, %v154
        %v500 = vpop.permute.xlu0 %499
        %502 = vset.pattern.permute.xlu0 3
        %503 = vperm.xlu0 %502, %v155
        %v504 = vpop.permute.xlu0 %503
        %506 = vset.pattern.permute.xlu0 3
        %507 = vperm.xlu0 %506, %v156
        %v508 = vpop.permute.xlu0 %507
        %510 = vset.pattern.permute.xlu0 3
        %511 = vperm.xlu0 %510, %v157
        %v512 = vpop.permute.xlu0 %511
        %514 = vset.pattern.permute.xlu0 3
        %515 = vperm.xlu0 %514, %v158
        %v516 = vpop.permute.xlu0 %515
        %518 = vset.pattern.permute.xlu0 3
        %519 = vperm.xlu0 %518, %v159
        %v520 = vpop.permute.xlu0 %519
        %522 = vset.pattern.permute.xlu0 3
        %523 = vperm.xlu0 %522, %v160
        %v524 = vpop.permute.xlu0 %523
        %v526 = vlaneseq
        %v527 = vshrl.u32 %v526, 7
        %v528 = vsub.s32 3, %v527
        %v529 = vrot.slane %v161, %v528
        %v530 = vmul.f32 %v464, %v529
        %v531 = vmul.f32 %v468, %v529
        %v532 = vmul.f32 %v472, %v529
        %v533 = vmul.f32 %v476, %v529
        %v534 = vmul.f32 %v480, %v529
        %v535 = vmul.f32 %v484, %v529
        %v536 = vmul.f32 %v488, %v529
        %v537 = vmul.f32 %v492, %v529
        %v538 = vmul.f32 %v496, %v529
        %v539 = vmul.f32 %v500, %v529
        %v540 = vmul.f32 %v504, %v529
        %v541 = vmul.f32 %v508, %v529
        %v542 = vmul.f32 %v512, %v529
        %v543 = vmul.f32 %v516, %v529
        %v544 = vmul.f32 %v520, %v529
        %v545 = vmul.f32 %v524, %v529
        %v546 = vadd.f32 %v446, %v530
        %v547 = vadd.f32 %v447, %v531
        %v548 = vadd.f32 %v448, %v532
        %v549 = vadd.f32 %v449, %v533
        %v550 = vadd.f32 %v450, %v534
        %v551 = vadd.f32 %v451, %v535
        %v552 = vadd.f32 %v452, %v536
        %v553 = vadd.f32 %v453, %v537
        %v554 = vadd.f32 %v454, %v538
        %v555 = vadd.f32 %v455, %v539
        %v556 = vadd.f32 %v456, %v540
        %v557 = vadd.f32 %v457, %v541
        %v558 = vadd.f32 %v458, %v542
        %v559 = vadd.f32 %v459, %v543
        %v560 = vadd.f32 %v460, %v544
        %v561 = vadd.f32 %v461, %v545
        %562 = vset.pattern.permute.xlu0 4
        %563 = vperm.xlu0 %562, %v145
        %v564 = vpop.permute.xlu0 %563
        %566 = vset.pattern.permute.xlu0 4
        %567 = vperm.xlu0 %566, %v146
        %v568 = vpop.permute.xlu0 %567
        %570 = vset.pattern.permute.xlu0 4
        %571 = vperm.xlu0 %570, %v147
        %v572 = vpop.permute.xlu0 %571
        %574 = vset.pattern.permute.xlu0 4
        %575 = vperm.xlu0 %574, %v148
        %v576 = vpop.permute.xlu0 %575
        %578 = vset.pattern.permute.xlu0 4
        %579 = vperm.xlu0 %578, %v149
        %v580 = vpop.permute.xlu0 %579
        %582 = vset.pattern.permute.xlu0 4
        %583 = vperm.xlu0 %582, %v150
        %v584 = vpop.permute.xlu0 %583
        %586 = vset.pattern.permute.xlu0 4
        %587 = vperm.xlu0 %586, %v151
        %v588 = vpop.permute.xlu0 %587
        %590 = vset.pattern.permute.xlu0 4
        %591 = vperm.xlu0 %590, %v152
        %v592 = vpop.permute.xlu0 %591
        %594 = vset.pattern.permute.xlu0 4
        %595 = vperm.xlu0 %594, %v153
        %v596 = vpop.permute.xlu0 %595
        %598 = vset.pattern.permute.xlu0 4
        %599 = vperm.xlu0 %598, %v154
        %v600 = vpop.permute.xlu0 %599
        %602 = vset.pattern.permute.xlu0 4
        %603 = vperm.xlu0 %602, %v155
        %v604 = vpop.permute.xlu0 %603
        %606 = vset.pattern.permute.xlu0 4
        %607 = vperm.xlu0 %606, %v156
        %v608 = vpop.permute.xlu0 %607
        %610 = vset.pattern.permute.xlu0 4
        %611 = vperm.xlu0 %610, %v157
        %v612 = vpop.permute.xlu0 %611
        %614 = vset.pattern.permute.xlu0 4
        %615 = vperm.xlu0 %614, %v158
        %v616 = vpop.permute.xlu0 %615
        %618 = vset.pattern.permute.xlu0 4
        %619 = vperm.xlu0 %618, %v159
        %v620 = vpop.permute.xlu0 %619
        %622 = vset.pattern.permute.xlu0 4
        %623 = vperm.xlu0 %622, %v160
        %v624 = vpop.permute.xlu0 %623
        %v626 = vlaneseq
        %v627 = vshrl.u32 %v626, 7
        %v628 = vsub.s32 4, %v627
        %v629 = vrot.slane %v161, %v628
        %v630 = vmul.f32 %v564, %v629
        %v631 = vmul.f32 %v568, %v629
        %v632 = vmul.f32 %v572, %v629
        %v633 = vmul.f32 %v576, %v629
        %v634 = vmul.f32 %v580, %v629
        %v635 = vmul.f32 %v584, %v629
        %v636 = vmul.f32 %v588, %v629
        %v637 = vmul.f32 %v592, %v629
        %v638 = vmul.f32 %v596, %v629
        %v639 = vmul.f32 %v600, %v629
        %v640 = vmul.f32 %v604, %v629
        %v641 = vmul.f32 %v608, %v629
        %v642 = vmul.f32 %v612, %v629
        %v643 = vmul.f32 %v616, %v629
        %v644 = vmul.f32 %v620, %v629
        %v645 = vmul.f32 %v624, %v629
        %v646 = vadd.f32 %v546, %v630
        %v647 = vadd.f32 %v547, %v631
        %v648 = vadd.f32 %v548, %v632
        %v649 = vadd.f32 %v549, %v633
        %v650 = vadd.f32 %v550, %v634
        %v651 = vadd.f32 %v551, %v635
        %v652 = vadd.f32 %v552, %v636
        %v653 = vadd.f32 %v553, %v637
        %v654 = vadd.f32 %v554, %v638
        %v655 = vadd.f32 %v555, %v639
        %v656 = vadd.f32 %v556, %v640
        %v657 = vadd.f32 %v557, %v641
        %v658 = vadd.f32 %v558, %v642
        %v659 = vadd.f32 %v559, %v643
        %v660 = vadd.f32 %v560, %v644
        %v661 = vadd.f32 %v561, %v645
        %v662 = vmax.f32 %v646, 0.0
        %v663 = vmax.f32 %v647, 0.0
        %v664 = vmax.f32 %v648, 0.0
        %v665 = vmax.f32 %v649, 0.0
        %v666 = vmax.f32 %v650, 0.0
        %v667 = vmax.f32 %v651, 0.0
        %v668 = vmax.f32 %v652, 0.0
        %v669 = vmax.f32 %v653, 0.0
        %v670 = vmax.f32 %v654, 0.0
        %v671 = vmax.f32 %v655, 0.0
        %v672 = vmax.f32 %v656, 0.0
        %v673 = vmax.f32 %v657, 0.0
        %v674 = vmax.f32 %v658, 0.0
        %v675 = vmax.f32 %v659, 0.0
        %v676 = vmax.f32 %v660, 0.0
        %v677 = vmax.f32 %v661, 0.0
        %v678 = vld [vmem:[%s1 + $0x8] sm:$0xff]
        %v679 = vld [vmem:[%s1 + $0x10] sm:$0xff]
        %v680 = vld [vmem:[%s1 + $0x18] sm:$0xff]
        %v681 = vld [vmem:[%s1 + $0x20] sm:$0xff]
        %v682 = vld [vmem:[%s1 + $0x28] sm:$0xff]
        %v683 = vld [vmem:[%s1 + $0x30] sm:$0xff]
        %v684 = vld [vmem:[%s1 + $0x38] sm:$0xff]
        %v685 = vld [vmem:[%s1 + $0x40] sm:$0xff]
        %v686 = vld [vmem:[%s1 + $0x48] sm:$0xff]
        %v687 = vld [vmem:[%s1 + $0x50] sm:$0xff]
        %v688 = vld [vmem:[%s1 + $0x58] sm:$0xff]
        %v689 = vld [vmem:[%s1 + $0x60] sm:$0xff]
        %v690 = vld [vmem:[%s1 + $0x68] sm:$0xff]
        %v691 = vld [vmem:[%s1 + $0x70] sm:$0xff]
        %v692 = vld [vmem:[%s1 + $0x78] sm:$0xff]
        %v693 = vld [vmem:[%s1 + $0x80] sm:$0xff]
        %v694 = vld [vmem:[%s1 + $0x108] sm:$0x1]
        %v695 = vlaneseq
        %v696 = vshrl.u32 %v695, 7
        %v697 = vsub.s32 0, %v696
        %v698 = vrot.slane %v694, %v697
        %699 = vmatprep.subr.mxu0 0.0
        %700 = vmatpush1.msra.mxu0 %v678
        %701 = vmatprep.subr.mxu0 0.0
        %702 = vmatpush1.msra.mxu0 %v679
        %703 = vmatprep.subr.mxu0 0.0
        %704 = vmatpush1.msra.mxu0 %v680
        %705 = vmatprep.subr.mxu0 0.0
        %706 = vmatpush1.msra.mxu0 %v681
        %707 = vmatprep.subr.mxu0 0.0
        %708 = vmatpush1.msra.mxu0 %v682
        %709 = vmatprep.subr.mxu0 0.0
        %710 = vmatpush1.msra.mxu0 %v683
        %711 = vmatprep.subr.mxu0 0.0
        %712 = vmatpush1.msra.mxu0 %v684
        %713 = vmatprep.subr.mxu0 0.0
        %714 = vmatpush1.msra.mxu0 %v685
        %715 = vmatprep.subr.mxu0 0.0
        %716 = vmatpush1.msra.mxu0 %v686
        %717 = vmatprep.subr.mxu0 0.0
        %718 = vmatpush1.msra.mxu0 %v687
        %719 = vmatprep.subr.mxu0 0.0
        %720 = vmatpush1.msra.mxu0 %v688
        %721 = vmatprep.subr.mxu0 0.0
        %722 = vmatpush1.msra.mxu0 %v689
        %723 = vmatprep.subr.mxu0 0.0
        %724 = vmatpush1.msra.mxu0 %v690
        %725 = vmatprep.subr.mxu0 0.0
        %726 = vmatpush1.msra.mxu0 %v691
        %727 = vmatprep.subr.mxu0 0.0
        %728 = vmatpush1.msra.mxu0 %v692
        %729 = vmatprep.subr.mxu0 0.0
        %730 = vmatpush1.msra.mxu0 %v693
        %731 = vmatprep.subr.mxu0 0.0
        %732 = vmatpush1.msra.mxu0 0.0
        %733 = vmatprep.subr.mxu0 0.0
        %734 = vmatpush1.msra.mxu0 0.0
        %735 = vmatprep.subr.mxu0 0.0
        %736 = vmatpush1.msra.mxu0 0.0
        %737 = vmatprep.subr.mxu0 0.0
        %738 = vmatpush1.msra.mxu0 0.0
        %739 = vmatprep.subr.mxu0 0.0
        %740 = vmatpush1.msra.mxu0 0.0
        %741 = vmatprep.subr.mxu0 0.0
        %742 = vmatpush1.msra.mxu0 0.0
        %743 = vmatprep.subr.mxu0 0.0
        %744 = vmatpush1.msra.mxu0 0.0
        %745 = vmatprep.subr.mxu0 0.0
        %746 = vmatpush1.msra.mxu0 0.0
        %747 = vmatprep.subr.mxu0 0.0
        %748 = vmatpush1.msra.mxu0 0.0
        %749 = vmatprep.subr.mxu0 0.0
        %750 = vmatpush1.msra.mxu0 0.0
        %751 = vmatprep.subr.mxu0 0.0
        %752 = vmatpush1.msra.mxu0 0.0
        %753 = vmatprep.subr.mxu0 0.0
        %754 = vmatpush1.msra.mxu0 0.0
        %755 = vmatprep.subr.mxu0 0.0
        %756 = vmatpush1.msra.mxu0 0.0
        %757 = vmatprep.subr.mxu0 0.0
        %758 = vmatpush1.msra.mxu0 0.0
        %759 = vmatprep.subr.mxu0 0.0
        %760 = vmatpush1.msra.mxu0 0.0
        %761 = vmatprep.subr.mxu0 0.0
        %762 = vmatpush1.msra.mxu0 0.0
        %763 = vmatprep.mubr.f32.mxu0 0.0
        %764 = vmatmul.mubr.f32.gmra.mrb[0].mxu0 %v662
        %v765 = vpop.f32.mrb[0].mxu0
        %v766 = vadd.f32 %v698, %v765
        %v767 = vpop.f32.mrb[0].mxu0
        %768 = vmatprep.mubr.f32.mxu0 0.0
        %769 = vmatmul.mubr.f32.gmra.mrb[0].mxu0 %v663
        %v770 = vpop.f32.mrb[0].mxu0
        %v771 = vadd.f32 %v698, %v770
        %v772 = vpop.f32.mrb[0].mxu0
        %773 = vmatprep.mubr.f32.mxu0 0.0
        %774 = vmatmul.mubr.f32.gmra.mrb[0].mxu0 %v664
        %v775 = vpop.f32.mrb[0].mxu0
        %v776 = vadd.f32 %v698, %v775
        %v777 = vpop.f32.mrb[0].mxu0
        %778 = vmatprep.mubr.f32.mxu0 0.0
        %779 = vmatmul.mubr.f32.gmra.mrb[0].mxu0 %v665
        %v780 = vpop.f32.mrb[0].mxu0
        %v781 = vadd.f32 %v698, %v780
        %v782 = vpop.f32.mrb[0].mxu0
        %783 = vmatprep.mubr.f32.mxu0 0.0
        %784 = vmatmul.mubr.f32.gmra.mrb[0].mxu0 %v666
        %v785 = vpop.f32.mrb[0].mxu0
        %v786 = vadd.f32 %v698, %v785
        %v787 = vpop.f32.mrb[0].mxu0
        %788 = vmatprep.mubr.f32.mxu0 0.0
        %789 = vmatmul.mubr.f32.gmra.mrb[0].mxu0 %v667
        %v790 = vpop.f32.mrb[0].mxu0
        %v791 = vadd.f32 %v698, %v790
        %v792 = vpop.f32.mrb[0].mxu0
        %793 = vmatprep.mubr.f32.mxu0 0.0
        %794 = vmatmul.mubr.f32.gmra.mrb[0].mxu0 %v668
        %v795 = vpop.f32.mrb[0].mxu0
        %v796 = vadd.f32 %v698, %v795
        %v797 = vpop.f32.mrb[0].mxu0
        %798 = vmatprep.mubr.f32.mxu0 0.0
        %799 = vmatmul.mubr.f32.gmra.mrb[0].mxu0 %v669
        %v800 = vpop.f32.mrb[0].mxu0
        %v801 = vadd.f32 %v698, %v800
        %v802 = vpop.f32.mrb[0].mxu0
        %803 = vmatprep.mubr.f32.mxu0 0.0
        %804 = vmatmul.mubr.f32.gmra.mrb[0].mxu0 %v670
        %v805 = vpop.f32.mrb[0].mxu0
        %v806 = vadd.f32 %v698, %v805
        %v807 = vpop.f32.mrb[0].mxu0
        %808 = vmatprep.mubr.f32.mxu0 0.0
        %809 = vmatmul.mubr.f32.gmra.mrb[0].mxu0 %v671
        %v810 = vpop.f32.mrb[0].mxu0
        %v811 = vadd.f32 %v698, %v810
        %v812 = vpop.f32.mrb[0].mxu0
        %813 = vmatprep.mubr.f32.mxu0 0.0
        %814 = vmatmul.mubr.f32.gmra.mrb[0].mxu0 %v672
        %v815 = vpop.f32.mrb[0].mxu0
        %v816 = vadd.f32 %v698, %v815
        %v817 = vpop.f32.mrb[0].mxu0
        %818 = vmatprep.mubr.f32.mxu0 0.0
        %819 = vmatmul.mubr.f32.gmra.mrb[0].mxu0 %v673
        %v820 = vpop.f32.mrb[0].mxu0
        %v821 = vadd.f32 %v698, %v820
        %v822 = vpop.f32.mrb[0].mxu0
        %823 = vmatprep.mubr.f32.mxu0 0.0
        %824 = vmatmul.mubr.f32.gmra.mrb[0].mxu0 %v674
        %v825 = vpop.f32.mrb[0].mxu0
        %v826 = vadd.f32 %v698, %v825
        %v827 = vpop.f32.mrb[0].mxu0
        %828 = vmatprep.mubr.f32.mxu0 0.0
        %829 = vmatmul.mubr.f32.gmra.mrb[0].mxu0 %v675
        %v830 = vpop.f32.mrb[0].mxu0
        %v831 = vadd.f32 %v698, %v830
        %v832 = vpop.f32.mrb[0].mxu0
        %833 = vmatprep.mubr.f32.mxu0 0.0
        %834 = vmatmul.mubr.f32.gmra.mrb[0].mxu0 %v676
        %v835 = vpop.f32.mrb[0].mxu0
        %v836 = vadd.f32 %v698, %v835
        %v837 = vpop.f32.mrb[0].mxu0
        %838 = vmatprep.mubr.f32.mxu0 0.0
        %839 = vmatmul.mubr.f32.gmra.mrb[0].mxu0 %v677
        %v840 = vpop.f32.mrb[0].mxu0
        %v841 = vadd.f32 %v698, %v840
        %v842 = vpop.f32.mrb[0].mxu0
        %843 = vdwg.mxu0
        %v844 = vmax.f32 %v766, 0.0
        %v845 = vmax.f32 %v771, 0.0
        %v846 = vmax.f32 %v776, 0.0
        %v847 = vmax.f32 %v781, 0.0
        %v848 = vmax.f32 %v786, 0.0
        %v849 = vmax.f32 %v791, 0.0
        %v850 = vmax.f32 %v796, 0.0
        %v851 = vmax.f32 %v801, 0.0
        %v852 = vmax.f32 %v806, 0.0
        %v853 = vmax.f32 %v811, 0.0
        %v854 = vmax.f32 %v816, 0.0
        %v855 = vmax.f32 %v821, 0.0
        %v856 = vmax.f32 %v826, 0.0
        %v857 = vmax.f32 %v831, 0.0
        %v858 = vmax.f32 %v836, 0.0
        %v859 = vmax.f32 %v841, 0.0
        %v860 = vld [vmem:[%s1 + $0x88] sm:$0xff]
        %v861 = vld [vmem:[%s1 + $0x90] sm:$0xff]
        %v862 = vld [vmem:[%s1 + $0x98] sm:$0xff]
        %v863 = vld [vmem:[%s1 + $0xa0] sm:$0xff]
        %v864 = vld [vmem:[%s1 + $0xa8] sm:$0xff]
        %v865 = vld [vmem:[%s1 + $0xb0] sm:$0xff]
        %v866 = vld [vmem:[%s1 + $0xb8] sm:$0xff]
        %v867 = vld [vmem:[%s1 + $0xc0] sm:$0xff]
        %v868 = vld [vmem:[%s1 + $0xc8] sm:$0xff]
        %v869 = vld [vmem:[%s1 + $0xd0] sm:$0xff]
        %v870 = vld [vmem:[%s1 + $0xd8] sm:$0xff]
        %v871 = vld [vmem:[%s1 + $0xe0] sm:$0xff]
        %v872 = vld [vmem:[%s1 + $0xe8] sm:$0xff]
        %v873 = vld [vmem:[%s1 + $0xf0] sm:$0xff]
        %v874 = vld [vmem:[%s1 + $0xf8] sm:$0xff]
        %v875 = vld [vmem:[%s1 + $0x100] sm:$0xff]
        %v876 = vld [vmem:[%s1 + $0x109] sm:$0x1]
        %v877 = vlaneseq
        %v878 = vshrl.u32 %v877, 7
        %v879 = vsub.s32 0, %v878
        %v880 = vrot.slane %v876, %v879
        %881 = vmatprep.subr.mxu0 0.0
        %882 = vmatpush1.msra.mxu0 %v860
        %883 = vmatprep.subr.mxu0 0.0
        %884 = vmatpush1.msra.mxu0 %v861
        %885 = vmatprep.subr.mxu0 0.0
        %886 = vmatpush1.msra.mxu0 %v862
        %887 = vmatprep.subr.mxu0 0.0
        %888 = vmatpush1.msra.mxu0 %v863
        %889 = vmatprep.subr.mxu0 0.0
        %890 = vmatpush1.msra.mxu0 %v864
        %891 = vmatprep.subr.mxu0 0.0
        %892 = vmatpush1.msra.mxu0 %v865
        %893 = vmatprep.subr.mxu0 0.0
        %894 = vmatpush1.msra.mxu0 %v866
        %895 = vmatprep.subr.mxu0 0.0
        %896 = vmatpush1.msra.mxu0 %v867
        %897 = vmatprep.subr.mxu0 0.0
        %898 = vmatpush1.msra.mxu0 %v868
        %899 = vmatprep.subr.mxu0 0.0
        %900 = vmatpush1.msra.mxu0 %v869
        %901 = vmatprep.subr.mxu0 0.0
        %902 = vmatpush1.msra.mxu0 %v870
        %903 = vmatprep.subr.mxu0 0.0
        %904 = vmatpush1.msra.mxu0 %v871
        %905 = vmatprep.subr.mxu0 0.0
        %906 = vmatpush1.msra.mxu0 %v872
        %907 = vmatprep.subr.mxu0 0.0
        %908 = vmatpush1.msra.mxu0 %v873
        %909 = vmatprep.subr.mxu0 0.0
        %910 = vmatpush1.msra.mxu0 %v874
        %911 = vmatprep.subr.mxu0 0.0
        %912 = vmatpush1.msra.mxu0 %v875
        %913 = vmatprep.subr.mxu0 0.0
        %914 = vmatpush1.msra.mxu0 0.0
        %915 = vmatprep.subr.mxu0 0.0
        %916 = vmatpush1.msra.mxu0 0.0
        %917 = vmatprep.subr.mxu0 0.0
        %918 = vmatpush1.msra.mxu0 0.0
        %919 = vmatprep.subr.mxu0 0.0
        %920 = vmatpush1.msra.mxu0 0.0
        %921 = vmatprep.subr.mxu0 0.0
        %922 = vmatpush1.msra.mxu0 0.0
        %923 = vmatprep.subr.mxu0 0.0
        %924 = vmatpush1.msra.mxu0 0.0
        %925 = vmatprep.subr.mxu0 0.0
        %926 = vmatpush1.msra.mxu0 0.0
        %927 = vmatprep.subr.mxu0 0.0
        %928 = vmatpush1.msra.mxu0 0.0
        %929 = vmatprep.subr.mxu0 0.0
        %930 = vmatpush1.msra.mxu0 0.0
        %931 = vmatprep.subr.mxu0 0.0
        %932 = vmatpush1.msra.mxu0 0.0
        %933 = vmatprep.subr.mxu0 0.0
        %934 = vmatpush1.msra.mxu0 0.0
        %935 = vmatprep.subr.mxu0 0.0
        %936 = vmatpush1.msra.mxu0 0.0
        %937 = vmatprep.subr.mxu0 0.0
        %938 = vmatpush1.msra.mxu0 0.0
        %939 = vmatprep.subr.mxu0 0.0
        %940 = vmatpush1.msra.mxu0 0.0
        %941 = vmatprep.subr.mxu0 0.0
        %942 = vmatpush1.msra.mxu0 0.0
        %943 = vmatprep.subr.mxu0 0.0
        %944 = vmatpush1.msra.mxu0 0.0
        %945 = vmatprep.mubr.f32.mxu0 0.0
        %946 = vmatmul.mubr.f32.gmra.mrb[0].mxu0 %v844
        %v947 = vpop.f32.mrb[0].mxu0
        %v948 = vadd.f32 %v880, %v947
        %v949 = vpop.f32.mrb[0].mxu0
        %950 = vmatprep.mubr.f32.mxu0 0.0
        %951 = vmatmul.mubr.f32.gmra.mrb[0].mxu0 %v845
        %v952 = vpop.f32.mrb[0].mxu0
        %v953 = vadd.f32 %v880, %v952
        %v954 = vpop.f32.mrb[0].mxu0
        %955 = vmatprep.mubr.f32.mxu0 0.0
        %956 = vmatmul.mubr.f32.gmra.mrb[0].mxu0 %v846
        %v957 = vpop.f32.mrb[0].mxu0
        %v958 = vadd.f32 %v880, %v957
        %v959 = vpop.f32.mrb[0].mxu0
        %960 = vmatprep.mubr.f32.mxu0 0.0
        %961 = vmatmul.mubr.f32.gmra.mrb[0].mxu0 %v847
        %v962 = vpop.f32.mrb[0].mxu0
        %v963 = vadd.f32 %v880, %v962
        %v964 = vpop.f32.mrb[0].mxu0
        %965 = vmatprep.mubr.f32.mxu0 0.0
        %966 = vmatmul.mubr.f32.gmra.mrb[0].mxu0 %v848
        %v967 = vpop.f32.mrb[0].mxu0
        %v968 = vadd.f32 %v880, %v967
        %v969 = vpop.f32.mrb[0].mxu0
        %970 = vmatprep.mubr.f32.mxu0 0.0
        %971 = vmatmul.mubr.f32.gmra.mrb[0].mxu0 %v849
        %v972 = vpop.f32.mrb[0].mxu0
        %v973 = vadd.f32 %v880, %v972
        %v974 = vpop.f32.mrb[0].mxu0
        %975 = vmatprep.mubr.f32.mxu0 0.0
        %976 = vmatmul.mubr.f32.gmra.mrb[0].mxu0 %v850
        %v977 = vpop.f32.mrb[0].mxu0
        %v978 = vadd.f32 %v880, %v977
        %v979 = vpop.f32.mrb[0].mxu0
        %980 = vmatprep.mubr.f32.mxu0 0.0
        %981 = vmatmul.mubr.f32.gmra.mrb[0].mxu0 %v851
        %v982 = vpop.f32.mrb[0].mxu0
        %v983 = vadd.f32 %v880, %v982
        %v984 = vpop.f32.mrb[0].mxu0
        %985 = vmatprep.mubr.f32.mxu0 0.0
        %986 = vmatmul.mubr.f32.gmra.mrb[0].mxu0 %v852
        %v987 = vpop.f32.mrb[0].mxu0
        %v988 = vadd.f32 %v880, %v987
        %v989 = vpop.f32.mrb[0].mxu0
        %990 = vmatprep.mubr.f32.mxu0 0.0
        %991 = vmatmul.mubr.f32.gmra.mrb[0].mxu0 %v853
        %v992 = vpop.f32.mrb[0].mxu0
        %v993 = vadd.f32 %v880, %v992
        %v994 = vpop.f32.mrb[0].mxu0
        %995 = vmatprep.mubr.f32.mxu0 0.0
        %996 = vmatmul.mubr.f32.gmra.mrb[0].mxu0 %v854
        %v997 = vpop.f32.mrb[0].mxu0
        %v998 = vadd.f32 %v880, %v997
        %v999 = vpop.f32.mrb[0].mxu0
        %1000 = vmatprep.mubr.f32.mxu0 0.0
        %1001 = vmatmul.mubr.f32.gmra.mrb[0].mxu0 %v855
        %v1002 = vpop.f32.mrb[0].mxu0
        %v1003 = vadd.f32 %v880, %v1002
        %v1004 = vpop.f32.mrb[0].mxu0
        %1005 = vmatprep.mubr.f32.mxu0 0.0
        %1006 = vmatmul.mubr.f32.gmra.mrb[0].mxu0 %v856
        %v1007 = vpop.f32.mrb[0].mxu0
        %v1008 = vadd.f32 %v880, %v1007
        %v1009 = vpop.f32.mrb[0].mxu0
        %1010 = vmatprep.mubr.f32.mxu0 0.0
        %1011 = vmatmul.mubr.f32.gmra.mrb[0].mxu0 %v857
        %v1012 = vpop.f32.mrb[0].mxu0
        %v1013 = vadd.f32 %v880, %v1012
        %v1014 = vpop.f32.mrb[0].mxu0
        %1015 = vmatprep.mubr.f32.mxu0 0.0
        %1016 = vmatmul.mubr.f32.gmra.mrb[0].mxu0 %v858
        %v1017 = vpop.f32.mrb[0].mxu0
        %v1018 = vadd.f32 %v880, %v1017
        %v1019 = vpop.f32.mrb[0].mxu0
        %1020 = vmatprep.mubr.f32.mxu0 0.0
        %1021 = vmatmul.mubr.f32.gmra.mrb[0].mxu0 %v859
        %v1022 = vpop.f32.mrb[0].mxu0
        %v1023 = vadd.f32 %v880, %v1022
        %v1024 = vpop.f32.mrb[0].mxu0
        %1025 = vdwg.mxu0
        %v1026 = vlaneseq
        %v1027 = vand.u32 %v1026, 127
        %vm1028 = vcmp.lt.s32.totalorder %v1027, 2
        %v1029 = vsel %vm1028, %v948, -1e+30
        %v1030 = vsel %vm1028, %v953, -1e+30
        %v1031 = vsel %vm1028, %v958, -1e+30
        %v1032 = vsel %vm1028, %v963, -1e+30
        %v1033 = vsel %vm1028, %v968, -1e+30
        %v1034 = vsel %vm1028, %v973, -1e+30
        %v1035 = vsel %vm1028, %v978, -1e+30
        %v1036 = vsel %vm1028, %v983, -1e+30
        %v1037 = vsel %vm1028, %v988, -1e+30
        %v1038 = vsel %vm1028, %v993, -1e+30
        %v1039 = vsel %vm1028, %v998, -1e+30
        %v1040 = vsel %vm1028, %v1003, -1e+30
        %v1041 = vsel %vm1028, %v1008, -1e+30
        %v1042 = vsel %vm1028, %v1013, -1e+30
        %v1043 = vsel %vm1028, %v1018, -1e+30
        %v1044 = vsel %vm1028, %v1023, -1e+30
        %1045 = vmax.xlane.f32.xlu0 %v1029
        %v1046 = vpop.xlane.xlu0 %1045
        %1047 = vmax.xlane.f32.xlu0 %v1030
        %v1048 = vpop.xlane.xlu0 %1047
        %1049 = vmax.xlane.f32.xlu0 %v1031
        %v1050 = vpop.xlane.xlu0 %1049
        %1051 = vmax.xlane.f32.xlu0 %v1032
        %v1052 = vpop.xlane.xlu0 %1051
        %1053 = vmax.xlane.f32.xlu0 %v1033
        %v1054 = vpop.xlane.xlu0 %1053
        %1055 = vmax.xlane.f32.xlu0 %v1034
        %v1056 = vpop.xlane.xlu0 %1055
        %1057 = vmax.xlane.f32.xlu0 %v1035
        %v1058 = vpop.xlane.xlu0 %1057
        %1059 = vmax.xlane.f32.xlu0 %v1036
        %v1060 = vpop.xlane.xlu0 %1059
        %1061 = vmax.xlane.f32.xlu0 %v1037
        %v1062 = vpop.xlane.xlu0 %1061
        %1063 = vmax.xlane.f32.xlu0 %v1038
        %v1064 = vpop.xlane.xlu0 %1063
        %1065 = vmax.xlane.f32.xlu0 %v1039
        %v1066 = vpop.xlane.xlu0 %1065
        %1067 = vmax.xlane.f32.xlu0 %v1040
        %v1068 = vpop.xlane.xlu0 %1067
        %1069 = vmax.xlane.f32.xlu0 %v1041
        %v1070 = vpop.xlane.xlu0 %1069
        %1071 = vmax.xlane.f32.xlu0 %v1042
        %v1072 = vpop.xlane.xlu0 %1071
        %1073 = vmax.xlane.f32.xlu0 %v1043
        %v1074 = vpop.xlane.xlu0 %1073
        %1075 = vmax.xlane.f32.xlu0 %v1044
        %v1076 = vpop.xlane.xlu0 %1075
        %v1077 = vsub.f32 %v1029, %v1046
        %v1078 = vsub.f32 %v1030, %v1048
        %v1079 = vsub.f32 %v1031, %v1050
        %v1080 = vsub.f32 %v1032, %v1052
        %v1081 = vsub.f32 %v1033, %v1054
        %v1082 = vsub.f32 %v1034, %v1056
        %v1083 = vsub.f32 %v1035, %v1058
        %v1084 = vsub.f32 %v1036, %v1060
        %v1085 = vsub.f32 %v1037, %v1062
        %v1086 = vsub.f32 %v1038, %v1064
        %v1087 = vsub.f32 %v1039, %v1066
        %v1088 = vsub.f32 %v1040, %v1068
        %v1089 = vsub.f32 %v1041, %v1070
        %v1090 = vsub.f32 %v1042, %v1072
        %v1091 = vsub.f32 %v1043, %v1074
        %v1092 = vsub.f32 %v1044, %v1076
        %v1093 = vmul.f32 %v1077, 1.442695
        %v1094 = vpow.pop %v1093
        %v1095 = vmul.f32 %v1078, 1.442695
        %v1096 = vpow.pop %v1095
        %v1097 = vmul.f32 %v1079, 1.442695
        %v1098 = vpow.pop %v1097
        %v1099 = vmul.f32 %v1080, 1.442695
        %v1100 = vpow.pop %v1099
        %v1101 = vmul.f32 %v1081, 1.442695
        %v1102 = vpow.pop %v1101
        %v1103 = vmul.f32 %v1082, 1.442695
        %v1104 = vpow.pop %v1103
        %v1105 = vmul.f32 %v1083, 1.442695
        %v1106 = vpow.pop %v1105
        %v1107 = vmul.f32 %v1084, 1.442695
        %v1108 = vpow.pop %v1107
        %v1109 = vmul.f32 %v1085, 1.442695
        %v1110 = vpow.pop %v1109
        %v1111 = vmul.f32 %v1086, 1.442695
        %v1112 = vpow.pop %v1111
        %v1113 = vmul.f32 %v1087, 1.442695
        %v1114 = vpow.pop %v1113
        %v1115 = vmul.f32 %v1088, 1.442695
        %v1116 = vpow.pop %v1115
        %v1117 = vmul.f32 %v1089, 1.442695
        %v1118 = vpow.pop %v1117
        %v1119 = vmul.f32 %v1090, 1.442695
        %v1120 = vpow.pop %v1119
        %v1121 = vmul.f32 %v1091, 1.442695
        %v1122 = vpow.pop %v1121
        %v1123 = vmul.f32 %v1092, 1.442695
        %v1124 = vpow.pop %v1123
        %v1125 = vsel %vm1028, %v1094, 0.0
        %v1126 = vsel %vm1028, %v1096, 0.0
        %v1127 = vsel %vm1028, %v1098, 0.0
        %v1128 = vsel %vm1028, %v1100, 0.0
        %v1129 = vsel %vm1028, %v1102, 0.0
        %v1130 = vsel %vm1028, %v1104, 0.0
        %v1131 = vsel %vm1028, %v1106, 0.0
        %v1132 = vsel %vm1028, %v1108, 0.0
        %v1133 = vsel %vm1028, %v1110, 0.0
        %v1134 = vsel %vm1028, %v1112, 0.0
        %v1135 = vsel %vm1028, %v1114, 0.0
        %v1136 = vsel %vm1028, %v1116, 0.0
        %v1137 = vsel %vm1028, %v1118, 0.0
        %v1138 = vsel %vm1028, %v1120, 0.0
        %v1139 = vsel %vm1028, %v1122, 0.0
        %v1140 = vsel %vm1028, %v1124, 0.0
        %1141 = vadd.xlane.f32.xlu0 %v1125
        %v1142 = vpop.xlane.xlu0 %1141
        %1143 = vadd.xlane.f32.xlu0 %v1126
        %v1144 = vpop.xlane.xlu0 %1143
        %1145 = vadd.xlane.f32.xlu0 %v1127
        %v1146 = vpop.xlane.xlu0 %1145
        %1147 = vadd.xlane.f32.xlu0 %v1128
        %v1148 = vpop.xlane.xlu0 %1147
        %1149 = vadd.xlane.f32.xlu0 %v1129
        %v1150 = vpop.xlane.xlu0 %1149
        %1151 = vadd.xlane.f32.xlu0 %v1130
        %v1152 = vpop.xlane.xlu0 %1151
        %1153 = vadd.xlane.f32.xlu0 %v1131
        %v1154 = vpop.xlane.xlu0 %1153
        %1155 = vadd.xlane.f32.xlu0 %v1132
        %v1156 = vpop.xlane.xlu0 %1155
        %1157 = vadd.xlane.f32.xlu0 %v1133
        %v1158 = vpop.xlane.xlu0 %1157
        %1159 = vadd.xlane.f32.xlu0 %v1134
        %v1160 = vpop.xlane.xlu0 %1159
        %1161 = vadd.xlane.f32.xlu0 %v1135
        %v1162 = vpop.xlane.xlu0 %1161
        %1163 = vadd.xlane.f32.xlu0 %v1136
        %v1164 = vpop.xlane.xlu0 %1163
        %1165 = vadd.xlane.f32.xlu0 %v1137
        %v1166 = vpop.xlane.xlu0 %1165
        %1167 = vadd.xlane.f32.xlu0 %v1138
        %v1168 = vpop.xlane.xlu0 %1167
        %1169 = vadd.xlane.f32.xlu0 %v1139
        %v1170 = vpop.xlane.xlu0 %1169
        %1171 = vadd.xlane.f32.xlu0 %v1140
        %v1172 = vpop.xlane.xlu0 %1171
        %v1173 = vrcp.pop %v1142
        %v1174 = vmul.f32 %v1125, %v1173
        %v1175 = vrcp.pop %v1144
        %v1176 = vmul.f32 %v1126, %v1175
        %v1177 = vrcp.pop %v1146
        %v1178 = vmul.f32 %v1127, %v1177
        %v1179 = vrcp.pop %v1148
        %v1180 = vmul.f32 %v1128, %v1179
        %v1181 = vrcp.pop %v1150
        %v1182 = vmul.f32 %v1129, %v1181
        %v1183 = vrcp.pop %v1152
        %v1184 = vmul.f32 %v1130, %v1183
        %v1185 = vrcp.pop %v1154
        %v1186 = vmul.f32 %v1131, %v1185
        %v1187 = vrcp.pop %v1156
        %v1188 = vmul.f32 %v1132, %v1187
        %v1189 = vrcp.pop %v1158
        %v1190 = vmul.f32 %v1133, %v1189
        %v1191 = vrcp.pop %v1160
        %v1192 = vmul.f32 %v1134, %v1191
        %v1193 = vrcp.pop %v1162
        %v1194 = vmul.f32 %v1135, %v1193
        %v1195 = vrcp.pop %v1164
        %v1196 = vmul.f32 %v1136, %v1195
        %v1197 = vrcp.pop %v1166
        %v1198 = vmul.f32 %v1137, %v1197
        %v1199 = vrcp.pop %v1168
        %v1200 = vmul.f32 %v1138, %v1199
        %v1201 = vrcp.pop %v1170
        %v1202 = vmul.f32 %v1139, %v1201
        %v1203 = vrcp.pop %v1172
        %v1204 = vmul.f32 %v1140, %v1203
        %1205 = vst [vmem:[%s137] sm:$0xff] %v1174
        %1206 = vst [vmem:[%s137 + $0x8] sm:$0xff] %v1176
        %1207 = vst [vmem:[%s137 + $0x10] sm:$0xff] %v1178
        %1208 = vst [vmem:[%s137 + $0x18] sm:$0xff] %v1180
        %1209 = vst [vmem:[%s137 + $0x20] sm:$0xff] %v1182
        %1210 = vst [vmem:[%s137 + $0x28] sm:$0xff] %v1184
        %1211 = vst [vmem:[%s137 + $0x30] sm:$0xff] %v1186
        %1212 = vst [vmem:[%s137 + $0x38] sm:$0xff] %v1188
        %1213 = vst [vmem:[%s137 + $0x40] sm:$0xff] %v1190
        %1214 = vst [vmem:[%s137 + $0x48] sm:$0xff] %v1192
        %1215 = vst [vmem:[%s137 + $0x50] sm:$0xff] %v1194
        %1216 = vst [vmem:[%s137 + $0x58] sm:$0xff] %v1196
        %1217 = vst [vmem:[%s137 + $0x60] sm:$0xff] %v1198
        %1218 = vst [vmem:[%s137 + $0x68] sm:$0xff] %v1200
        %1219 = vst [vmem:[%s137 + $0x70] sm:$0xff] %v1202
        %1220 = vst [vmem:[%s137 + $0x78] sm:$0xff] %v1204
        %s1221 = sand.u32 %s71, 1
        %s1222 = scalar_lea.sflag [#allocation3], %s1221
        %s1223 = sand.u32 %s71, 1
        %s1224 = smul.addr %s1223, 128
        %s1225 = scalar_lea.vmem [#allocation2], %s1224
        // Predicated region
        $region29: #{tpu_custom_call.1} parent=27 // pred_check
          %p1226 = pneg %p81
        $region30: #{tpu_custom_call.1} parent=27 // pred_check_branch
          %1228 = sbr.rel (%p1226) target = $region32
        $region31: #{tpu_custom_call.1} parent=27 // pred_region
          %s1229 = smul.u32 16, %s16
          %s1231 = ssub.s32 2048, 2048
          %1232 = vsyncadd %s1222, %s1231
          %s1233 = smul.addr %s1229, 128
          %s1234 = scalar_lea.hbm %s2, %s1233
          %s1235 = sshll.u32 %s1225, 4
          %s1236 = int_to_ptr.vmem [resolvable:$true] %s1235
          %1241 = dma.vmem_to_hbm [thread:$0]  %s1236, 2048, %s1234, %s1222, 128, 128, 8
        $region32: #{tpu_custom_call.1} parent=27 // pred_fallthru
          _
      $region28: #{tpu_custom_call.1} parent=5 // pred_fallthru
        _
      %p1242 = scmp.le.s32.totalorder 2, %s11
      // Predicated region
      $region33: #{tpu_custom_call.1} parent=5 // pred_check
        %p1243 = pneg %p1242
      $region34: #{tpu_custom_call.1} parent=5 // pred_check_branch
        %1245 = sbr.rel (%p1243) target = $region36
      $region35: #{tpu_custom_call.1} parent=5 // pred_region
        %s1246 = ssub.s32 %s11, 2
        // Predicated region
        $region37: #{tpu_custom_call.1} parent=35 // pred_check
          %p1247 = pneg %p87
        $region38: #{tpu_custom_call.1} parent=35 // pred_check_branch
          %1249 = sbr.rel (%p1247) target = $region40
        $region39: #{tpu_custom_call.1} parent=35 // pred_region
          %s1250 = sand.u32 %s72, 1
          %s1251 = scalar_lea.sflag [#allocation3], %s1250
          %s1252 = sand.u32 %s72, 1
          %s1253 = smul.addr %s1252, 128
          %s1254 = scalar_lea.vmem [#allocation2], %s1253
          %1255 = dma.done %s1251, 2048
        $region40: #{tpu_custom_call.1} parent=35 // pred_fallthru
          _
      $region36: #{tpu_custom_call.1} parent=5 // pred_fallthru
        _
    $region6: #{tpu_custom_call.1} parent=1 // loop_footer
      %s15 = sadd.s32 1, %s11
    $region7: #{tpu_custom_call.1} parent=1 // loop_footer_branch
      %10 = sbr.rel target = $region3
    $region8: #{tpu_custom_call.1} parent=1 // loop_exit
      _
    %1256 = vsyncpa [#allocation3], 1
    %s1257 = scalar_lea.sflag [#allocation3], 1
    %1258 = vsyncpa %s1257, 1

</llo_original>
